<compile_context>
chip_gen: v7x
topology: tpu7x:2x2x1
jax: 0.10.0
libtpu: 0.0.40
codegen_flags: <defaults>
</compile_context>

<pallas_src>
import jax
import jax.numpy as jnp
from jax import lax
from jax.experimental import pallas as pl
from jax.experimental.pallas import tpu as pltpu

_LANES = 128  # lane width: the batch-tile (last dim of the output block) is a multiple of this


def _round_up(n, m):
    return ((n + m - 1) // m) * m


def _linear_kernel(x_ref, w_ref, b_ref, o_ref):
    # x_ref: (TB, E)  VMEM  current batch tile (rows of x)
    # w_ref: (C, E)   VMEM  PyTorch-layout weight (rows = classes), resident across the grid
    # b_ref: (C, 1)   VMEM  bias column, resident
    # o_ref: (C, TB)  VMEM  lane-dense transposed logits tile
    #
    # (C, E) x (TB, E) contracting E on both sides -> (C, TB).
    # lhs is already (M, K); rhs contracted on its last dim is the native a @ b.T MXU
    # pattern, so no XLU transpose is emitted for either operand.
    acc = lax.dot_general(
        w_ref[...], x_ref[...],
        dimension_numbers=(((1,), (1,)), ((), ())),
        preferred_element_type=jnp.float32,
    )
    o_ref[...] = (acc + b_ref[...]).astype(o_ref.dtype)
    # TODO(synk): pred()'s softmax(dim=1) is not part of forward(); if ever needed it fuses
    # here for free (sublane max/sum over C, jnp.exp on the EUP, pl.reciprocal(..., approx=True))
    # right before the store, saving a full extra HBM pass over the logits.


def logistic_regression_forward(x, weight, bias, *, block_rows=4096):
    """x: [B, E], weight: [C, E] (PyTorch nn.Linear layout), bias: [C] -> logits [B, C]."""
    B, E = x.shape
    C, E_w = weight.shape
    assert E == E_w and bias.shape == (C,)

    # Batch tile TB = lane dim of the output block -> multiple of 128. 128-alignment also
    # satisfies the sublane needs of the (TB, E) x block for f32(8)/bf16(16)/int8|fp8(32).
    TB = max(_LANES, min(_round_up(block_rows, _LANES), _round_up(B, _LANES)))
    # v7x has 2 TensorCores: if a single tile would swallow the whole batch but the batch is
    # big enough for two lane-aligned tiles, split so the parallel grid has >= 2 blocks.
    if pl.cdiv(B, TB) < 2 and B > _LANES:
        TB = _round_up(pl.cdiv(B, 2), _LANES)

    grid = (pl.cdiv(B, TB),)
    itemsize = jnp.dtype(x.dtype).itemsize
    w_itemsize = jnp.dtype(weight.dtype).itemsize

    bias_col = bias.reshape(C, 1)

    out_t = pl.pallas_call(
        _linear_kernel,
        out_shape=jax.ShapeDtypeStruct((C, B), x.dtype),
        grid=grid,
        in_specs=[
            pl.BlockSpec((TB, E), lambda i: (i, 0)),   # batch tile of x (ragged last block ok)
            pl.BlockSpec((C, E), lambda i: (0, 0)),    # tiny weight, resident
            pl.BlockSpec((C, 1), lambda i: (0, 0)),    # bias column, resident
        ],
        out_specs=pl.BlockSpec((C, TB), lambda i: (0, i)),   # lane-dense transposed logits
        compiler_params=pltpu.CompilerParams(
            dimension_semantics=("parallel",),          # shard batch blocks across TCs
        ),
        cost_estimate=pl.CostEstimate(
            flops=2 * B * E * C,
            transcendentals=0,
            bytes_accessed=(B * E * itemsize            # read x once
                            + C * E * w_itemsize        # read W once
                            + C * w_itemsize            # read b once
                            + B * C * itemsize),        # write logits once
        ),
    )(x, weight, bias_col)

    # (C, B) -> (B, C); the transpose is a cheap pass over the tiny logits array.
    return out_t.T


if __name__ == "__main__":
    # Small, module-consistent shapes: embed_size=32, class_count=4.
    batch, embed_size, class_count = 16, 32, 4

    key = jax.random.PRNGKey(0)
    kx, kw, kb = jax.random.split(key, 3)
    x = jax.random.normal(kx, (batch, embed_size), dtype=jnp.float32)
    # Deterministic synthetic parameters (nn.Linear shapes: W [C, E], b [C]).
    weight = jax.random.normal(kw, (class_count, embed_size), dtype=jnp.float32) * 0.1
    bias = jax.random.normal(kb, (class_count,), dtype=jnp.float32) * 0.1

    # Case 1: single (partial) block — batch smaller than one 128-row tile.
    out = logistic_regression_forward(x, weight, bias)
    jax.block_until_ready(out)
    ref = x @ weight.T + bias
    assert out.shape == (batch, class_count)
    # Loose tolerance: default-precision MXU matmul may use bf16 passes for f32 operands,
    # on either the kernel or the XLA reference side; real layout/bias bugs are O(0.1+).
    assert jnp.allclose(out, ref, atol=2e-2, rtol=2e-2)

    # Case 2: multi-block parallel grid with a ragged last block (300 = 2*128 + 44).
    batch2 = 300
    x2 = jax.random.normal(kx, (batch2, embed_size), dtype=jnp.float32)
    out2 = logistic_regression_forward(x2, weight, bias, block_rows=128)
    jax.block_until_ready(out2)
    ref2 = x2 @ weight.T + bias
    assert out2.shape == (batch2, class_count)
    assert jnp.allclose(out2, ref2, atol=2e-2, rtol=2e-2)

    print("KERNEL_OK")
</pallas_src>

<mosaic_0001>
module attributes {stable_mosaic.version = 11 : i64} {
  func.func @_linear_kernel(%arg0: i32, %arg1: memref<128x32xf32, #tpu.memory_space<vmem>>, %arg2: memref<4x32xf32, #tpu.memory_space<vmem>>, %arg3: memref<4x1xf32, #tpu.memory_space<vmem>>, %arg4: memref<4x128xf32, #tpu.memory_space<vmem>>) attributes {dimension_semantics = [#tpu.dimension_semantics<parallel>], iteration_bounds = array<i64: 1>, scalar_prefetch = 0 : i64, scratch_operands = 0 : i64, tpu.core_type = #tpu.core_type<tc>, window_params = [{transform_indices = @transform_0, window_bounds = array<i64: 128, 32>}, {pipeline_mode = #tpu.pipeline_mode<synchronous>, transform_indices = @transform_1, window_bounds = array<i64: 4, 32>}, {pipeline_mode = #tpu.pipeline_mode<synchronous>, transform_indices = @transform_2, window_bounds = array<i64: 4, 1>}, {transform_indices = @transform_3, window_bounds = array<i64: 4, 128>}]} {
    %c0 = arith.constant 0 : index
    %c0_0 = arith.constant 0 : index
    %0 = vector.load %arg2[%c0, %c0_0] : memref<4x32xf32, #tpu.memory_space<vmem>>, vector<4x32xf32>
    %c0_1 = arith.constant 0 : index
    %c0_2 = arith.constant 0 : index
    %1 = vector.load %arg1[%c0_1, %c0_2] : memref<128x32xf32, #tpu.memory_space<vmem>>, vector<128x32xf32>
    %cst = arith.constant dense<0.000000e+00> : vector<4x128xf32>
    %2 = tpu.matmul %0, %1, %cst {dimension_numbers = #tpu.dot_dimension_numbers<[1], [1], [0], [0], [0, 0, 1, 0], [], []>} : vector<4x32xf32>, vector<128x32xf32>, vector<4x128xf32> -> vector<4x128xf32>
    %c0_3 = arith.constant 0 : index
    %c0_4 = arith.constant 0 : index
    %3 = vector.load %arg3[%c0_3, %c0_4] : memref<4x1xf32, #tpu.memory_space<vmem>>, vector<4x1xf32>
    %4 = vector.broadcast %3 : vector<4x1xf32> to vector<4x128xf32>
    %5 = arith.addf %2, %4 : vector<4x128xf32>
    %c0_5 = arith.constant 0 : index
    %c0_6 = arith.constant 0 : index
    %6 = vector.load %arg4[%c0_5, %c0_6] : memref<4x128xf32, #tpu.memory_space<vmem>>, vector<4x128xf32>
    tpu.vector_store %arg4[%c0_5, %c0_6], %5 {strides = array<i32>} : memref<4x128xf32, #tpu.memory_space<vmem>>, vector<4x128xf32>,
    return
  }
  func.func @transform_0(%arg0: i32) -> (i32, i32) {
    %c0_i32 = arith.constant 0 : i32
    %c0_i32_0 = arith.constant 0 : i32
    return %arg0, %c0_i32 : i32, i32
  }
  func.func @transform_1(%arg0: i32) -> (i32, i32) {
    %c0_i32 = arith.constant 0 : i32
    %c0_i32_0 = arith.constant 0 : i32
    %c0_i32_1 = arith.constant 0 : i32
    return %c0_i32, %c0_i32_0 : i32, i32
  }
  func.func @transform_2(%arg0: i32) -> (i32, i32) {
    %c0_i32 = arith.constant 0 : i32
    %c0_i32_0 = arith.constant 0 : i32
    %c0_i32_1 = arith.constant 0 : i32
    return %c0_i32, %c0_i32_0 : i32, i32
  }
  func.func @transform_3(%arg0: i32) -> (i32, i32) {
    %c0_i32 = arith.constant 0 : i32
    %c0_i32_0 = arith.constant 0 : i32
    return %c0_i32, %arg0 : i32, i32
  }
}

</mosaic_0001>

<llo_original>
// kernel: tpu_custom_call.1
$region0: #{tpu_custom_call.1}
  #allocation0 [shape = 'u32[]', space=smem, size = 0x4, offset = 0x4, fixed_abs, tag = 'smem constant byte address 0x4 - core index']
  #allocation1 [shape = 'u32[144,128]{1,0:T(1,128)}', space=vmem, size = 0x12000, scoped, tag = 'internal scratch']
  %s0 = inlined_call_operand.hbm [shape: f32[16,32], index: 0, kind: input, shape index: {}]
  %s1 = inlined_call_operand.vmem [shape: f32[4,32], index: 1, kind: input, shape index: {}]
  %s2 = inlined_call_operand.vmem [shape: f32[4,1], index: 2, kind: input, shape index: {}]
  %s3 = inlined_call_operand.hbm [shape: f32[4,16], index: 3, kind: output, shape index: {}]
  %s4 = sld [smem:[#allocation0]]
  $region26: #{tpu_custom_call.1} parent=0
    _
  %s6 = ssub.s32 1, %s4
  %s7 = scalar_select 0, %s6, %s4
  $region1: #{tpu_custom_call.1} parent=0
    #allocation2 [shape = 'u8[65536]{0}', space=vmem, size = 0x10000, scoped, tag = 'input window, operand 0, single buffered']
    #allocation3 [shape = 's32[1]{0}', space=sflag, size = 0x4, scoped, tag = 'scoped memory for tpu_custom_call.1']
    #allocation4 [shape = 's32[1]{0}', space=sflag, size = 0x4, scoped, tag = 'scoped memory for tpu_custom_call.1']
    #allocation5 [shape = 'u8[2048]{0}', space=vmem, size = 0x800, scoped, tag = 'output window, operand 0, single buffered']
    %8 = vsyncpa [#allocation3], 0
    %9 = vsyncpa [#allocation4], 0
    // Predicated region
    $region2: #{tpu_custom_call.1} parent=1 // pred_check
      _
    $region3: #{tpu_custom_call.1} parent=1 // pred_check_branch
      %11 = sbr.rel (0) target = $region5
    $region4: #{tpu_custom_call.1} parent=1 // pred_region
      %s13 = ssub.s32 2048, 256
      %14 = vsyncadd [#allocation3], %s13
      %s15 = sshll.u32 [#allocation2], 4
      %s16 = int_to_ptr.vmem [resolvable:$true] %s15
      %21 = dma.hbm_to_vmem [thread:$0]  %s0, 256, %s16, [#allocation3], 128, 128, 8
    $region5: #{tpu_custom_call.1} parent=1 // pred_fallthru
      _
    // Predicated region
    $region6: #{tpu_custom_call.1} parent=1 // pred_check
      _
    $region7: #{tpu_custom_call.1} parent=1 // pred_check_branch
      %23 = sbr.rel (0) target = $region9
    $region8: #{tpu_custom_call.1} parent=1 // pred_region
      _
    $region9: #{tpu_custom_call.1} parent=1 // pred_fallthru
      _
    // Predicated region
    $region10: #{tpu_custom_call.1} parent=1 // pred_check
      _
    $region11: #{tpu_custom_call.1} parent=1 // pred_check_branch
      %25 = sbr.rel (0) target = $region13
    $region12: #{tpu_custom_call.1} parent=1 // pred_region
      _
    $region13: #{tpu_custom_call.1} parent=1 // pred_fallthru
      _
    // Predicated region
    $region14: #{tpu_custom_call.1} parent=1 // pred_check
      _
    $region15: #{tpu_custom_call.1} parent=1 // pred_check_branch
      %27 = sbr.rel (0) target = $region17
    $region16: #{tpu_custom_call.1} parent=1 // pred_region
      %28 = dma.done [#allocation3], 2048
    $region17: #{tpu_custom_call.1} parent=1 // pred_fallthru
      _
    %v29 = vld [vmem:[%s1] sm:$0xf]
    %v30 = vld [vmem:[#allocation2] sm:$0xff]
    %v31 = vld [vmem:[#allocation2 + $0x8] sm:$0xff]
    %v32 = vld [vmem:[#allocation2 + $0x10] sm:$0xff]
    %v33 = vld [vmem:[#allocation2 + $0x18] sm:$0xff]
    %v34 = vld [vmem:[#allocation2 + $0x20] sm:$0xff]
    %v35 = vld [vmem:[#allocation2 + $0x28] sm:$0xff]
    %v36 = vld [vmem:[#allocation2 + $0x30] sm:$0xff]
    %v37 = vld [vmem:[#allocation2 + $0x38] sm:$0xff]
    %v38 = vld [vmem:[#allocation2 + $0x40] sm:$0xff]
    %v39 = vld [vmem:[#allocation2 + $0x48] sm:$0xff]
    %v40 = vld [vmem:[#allocation2 + $0x50] sm:$0xff]
    %v41 = vld [vmem:[#allocation2 + $0x58] sm:$0xff]
    %v42 = vld [vmem:[#allocation2 + $0x60] sm:$0xff]
    %v43 = vld [vmem:[#allocation2 + $0x68] sm:$0xff]
    %v44 = vld [vmem:[#allocation2 + $0x70] sm:$0xff]
    %v45 = vld [vmem:[#allocation2 + $0x78] sm:$0xff]
    %v46 = vld [vmem:[%s2] sm:$0xf]
    %48 = vset.pattern.permute.xlu0 0
    %49 = vperm.xlu0 %48, %v46
    %v50 = vpop.permute.xlu0 %49
    %vm52 = vcmask 261120
    %v54 = vsel %vm52, %v29, 0
    %v57 = vsel %vm52, %v30, 0
    %v60 = vsel %vm52, %v31, 0
    %v63 = vsel %vm52, %v32, 0
    %v66 = vsel %vm52, %v33, 0
    %v69 = vsel %vm52, %v34, 0
    %v72 = vsel %vm52, %v35, 0
    %v75 = vsel %vm52, %v36, 0
    %v78 = vsel %vm52, %v37, 0
    %v81 = vsel %vm52, %v38, 0
    %v84 = vsel %vm52, %v39, 0
    %v87 = vsel %vm52, %v40, 0
    %v90 = vsel %vm52, %v41, 0
    %v93 = vsel %vm52, %v42, 0
    %v96 = vsel %vm52, %v43, 0
    %v99 = vsel %vm52, %v44, 0
    %v102 = vsel %vm52, %v45, 0
    %104 = vmatprep.subr.mxu0 0.0
    %105 = vmatpush1.xpose.msra.mxu0 %v57
    %106 = vmatprep.subr.mxu0 0.0
    %107 = vmatpush1.xpose.msra.mxu0 %v60
    %108 = vmatprep.subr.mxu0 0.0
    %109 = vmatpush1.xpose.msra.mxu0 %v63
    %110 = vmatprep.subr.mxu0 0.0
    %111 = vmatpush1.xpose.msra.mxu0 %v66
    %112 = vmatprep.subr.mxu0 0.0
    %113 = vmatpush1.xpose.msra.mxu0 %v69
    %114 = vmatprep.subr.mxu0 0.0
    %115 = vmatpush1.xpose.msra.mxu0 %v72
    %116 = vmatprep.subr.mxu0 0.0
    %117 = vmatpush1.xpose.msra.mxu0 %v75
    %118 = vmatprep.subr.mxu0 0.0
    %119 = vmatpush1.xpose.msra.mxu0 %v78
    %120 = vmatprep.subr.mxu0 0.0
    %121 = vmatpush1.xpose.msra.mxu0 %v81
    %122 = vmatprep.subr.mxu0 0.0
    %123 = vmatpush1.xpose.msra.mxu0 %v84
    %124 = vmatprep.subr.mxu0 0.0
    %125 = vmatpush1.xpose.msra.mxu0 %v87
    %126 = vmatprep.subr.mxu0 0.0
    %127 = vmatpush1.xpose.msra.mxu0 %v90
    %128 = vmatprep.subr.mxu0 0.0
    %129 = vmatpush1.xpose.msra.mxu0 %v93
    %130 = vmatprep.subr.mxu0 0.0
    %131 = vmatpush1.xpose.msra.mxu0 %v96
    %132 = vmatprep.subr.mxu0 0.0
    %133 = vmatpush1.xpose.msra.mxu0 %v99
    %134 = vmatprep.subr.mxu0 0.0
    %135 = vmatpush1.xpose.msra.mxu0 %v102
    %136 = vmatprep.subr.mxu0 0.0
    %137 = vmatpush1.xpose.msra.mxu0 0.0
    %138 = vmatprep.subr.mxu0 0.0
    %139 = vmatpush1.xpose.msra.mxu0 0.0
    %140 = vmatprep.subr.mxu0 0.0
    %141 = vmatpush1.xpose.msra.mxu0 0.0
    %142 = vmatprep.subr.mxu0 0.0
    %143 = vmatpush1.xpose.msra.mxu0 0.0
    %144 = vmatprep.subr.mxu0 0.0
    %145 = vmatpush1.xpose.msra.mxu0 0.0
    %146 = vmatprep.subr.mxu0 0.0
    %147 = vmatpush1.xpose.msra.mxu0 0.0
    %148 = vmatprep.subr.mxu0 0.0
    %149 = vmatpush1.xpose.msra.mxu0 0.0
    %150 = vmatprep.subr.mxu0 0.0
    %151 = vmatpush1.xpose.msra.mxu0 0.0
    %152 = vmatprep.subr.mxu0 0.0
    %153 = vmatpush1.xpose.msra.mxu0 0.0
    %154 = vmatprep.subr.mxu0 0.0
    %155 = vmatpush1.xpose.msra.mxu0 0.0
    %156 = vmatprep.subr.mxu0 0.0
    %157 = vmatpush1.xpose.msra.mxu0 0.0
    %158 = vmatprep.subr.mxu0 0.0
    %159 = vmatpush1.xpose.msra.mxu0 0.0
    %160 = vmatprep.subr.mxu0 0.0
    %161 = vmatpush1.xpose.msra.mxu0 0.0
    %162 = vmatprep.subr.mxu0 0.0
    %163 = vmatpush1.xpose.msra.mxu0 0.0
    %164 = vmatprep.subr.mxu0 0.0
    %165 = vmatpush1.xpose.msra.mxu0 0.0
    %166 = vmatprep.subr.mxu0 0.0
    %167 = vmatpush1.xpose.msra.mxu0 0.0
    %168 = vmatprep.mubr.f32.mxu0 0.0
    %169 = vmatmul.mubr.f32.gmra.mrb[0].mxu0 %v54
    %v170 = vpop.f32.mrb[0].mxu0
    %v171 = vadd.f32 %v50, %v170
    %v172 = vpop.f32.mrb[0].mxu0
    %173 = vdwg.mxu0
    %174 = vst [vmem:[#allocation5] sm:$0xf] %v171
    // Predicated region
    $region18: #{tpu_custom_call.1} parent=1 // pred_check
      _
    $region19: #{tpu_custom_call.1} parent=1 // pred_check_branch
      %176 = sbr.rel (0) target = $region21
    $region20: #{tpu_custom_call.1} parent=1 // pred_region
      %s178 = ssub.s32 64, 64
      %179 = vsyncadd [#allocation4], %s178
      %s181 = sshll.u32 [#allocation5], 4
      %s182 = int_to_ptr.vmem [resolvable:$true] %s181
      %184 = dma.vmem_to_hbm [thread:$0]  %s182, 64, %s3, [#allocation4]
    $region21: #{tpu_custom_call.1} parent=1 // pred_fallthru
      _
    // Predicated region
    $region22: #{tpu_custom_call.1} parent=1 // pred_check
      _
    $region23: #{tpu_custom_call.1} parent=1 // pred_check_branch
      %186 = sbr.rel (0) target = $region25
    $region24: #{tpu_custom_call.1} parent=1 // pred_region
      %187 = dma.done [#allocation4], 64
    $region25: #{tpu_custom_call.1} parent=1 // pred_fallthru
      _
    %188 = vsyncpa [#allocation3], 1
    %189 = vsyncpa [#allocation4], 1

</llo_original>
